<compile_context>
chip_gen: v7x
topology: tpu7x:2x2x1
jax: 0.10.0
libtpu: 0.0.40
codegen_flags: <defaults>
</compile_context>

<pallas_src>
import jax
import jax.numpy as jnp
from jax.experimental import pallas as pl
from jax.experimental.pallas import tpu as pltpu


def _cat_fusion_kernel(x1_ref, x2_ref, x3_ref, w_ref, o_ref):
    # x*_ref: (1, c, tile_p)   channels on sublanes, pixels lane-dense
    # w_ref : (3, c_out, c)    resident, constant across the whole grid
    # o_ref : (1, c_out, tile_p)
    acc = jnp.dot(w_ref[0], x1_ref[0], preferred_element_type=jnp.float32)
    acc += jnp.dot(w_ref[1], x2_ref[0], preferred_element_type=jnp.float32)
    acc += jnp.dot(w_ref[2], x3_ref[0], preferred_element_type=jnp.float32)
    o_ref[0] = acc.astype(o_ref.dtype)


def cat_fusion_pallas(feat_list, weight, *, tile_p=2048):
    """feat_list: 3 arrays of shape [n, c, s, h, w]; weight: [c_out, 3c, 1, 1]."""
    assert len(feat_list) == 3
    n, c, s, h, w = feat_list[0].shape
    c_out = weight.shape[0]
    assert weight.shape == (c_out, 3 * c, 1, 1)
    dtype = feat_list[0].dtype
    dtype_bytes = jnp.dtype(dtype).itemsize

    LANE = 128
    P = s * h * w
    # Pixel tile on the lane axis: a multiple of 128, capped at (padded) P.
    tile_p = max(LANE, (min(tile_p, pl.cdiv(P, LANE) * LANE) // LANE) * LANE)
    P_pad = pl.cdiv(P, tile_p) * tile_p

    # Free reshape of contiguous trailing dims; pad pixel axis once if ragged.
    def to_mat(f):
        x = f.reshape(n, c, P)
        if P_pad != P:
            x = jnp.pad(x, ((0, 0), (0, 0), (0, P_pad - P)))
        return x

    x1, x2, x3 = (to_mat(f) for f in feat_list)

    # Merged weight buffer: [c_out, 3c] -> [3, c_out, c]  (w3[i] @ x_i).
    w3 = jnp.transpose(weight[:, :, 0, 0].reshape(c_out, 3, c), (1, 0, 2))
    w3 = w3.astype(dtype)

    grid = (n, P_pad // tile_p)
    x_spec = pl.BlockSpec((1, c, tile_p), lambda b, p: (b, 0, p))
    w_spec = pl.BlockSpec((3, c_out, c), lambda b, p: (0, 0, 0))
    o_spec = pl.BlockSpec((1, c_out, tile_p), lambda b, p: (b, 0, p))

    cost = pl.CostEstimate(
        flops=2 * n * P_pad * (3 * c) * c_out,
        transcendentals=0,
        bytes_accessed=(3 * n * P_pad * c + n * P_pad * c_out
                        + 3 * c * c_out) * dtype_bytes,
    )

    out_flat = pl.pallas_call(
        _cat_fusion_kernel,
        out_shape=jax.ShapeDtypeStruct((n, c_out, P_pad), dtype),
        grid_spec=pltpu.PrefetchScalarGridSpec(
            num_scalar_prefetch=0,
            grid=grid,
            in_specs=[x_spec, x_spec, x_spec, w_spec],
            out_specs=o_spec,
        ),
        compiler_params=pltpu.CompilerParams(
            dimension_semantics=("parallel", "parallel"),
            vmem_limit_bytes=64 * 1024 * 1024,
        ),
        cost_estimate=cost,
    )(x1, x2, x3, w3)

    # Slice off pixel padding (no-op when P_pad == P), then free reshape back.
    out = out_flat[:, :, :P].reshape(n, c_out, s, h, w)
    return out


def cat_fusion_reference(feat_list, weight):
    feats = jnp.concatenate(feat_list, axis=1)                 # [n, 3c, s, h, w]
    w2d = weight[:, :, 0, 0]                                   # [c_out, 3c]
    return jnp.einsum('oc,ncshw->noshw', w2d, feats)


if __name__ == "__main__":
    key = jax.random.PRNGKey(0)

    def run_case(n, c, s, h, w, key):
        k1, k2, k3, kw = jax.random.split(key, 4)
        f1 = jax.random.normal(k1, (n, c, s, h, w), jnp.float32)
        f2 = jax.random.normal(k2, (n, c, s, h, w), jnp.float32)
        f3 = jax.random.normal(k3, (n, c, s, h, w), jnp.float32)
        # conv1x1(in_channels*3, in_channels), bias=False
        weight = jax.random.normal(kw, (c, 3 * c, 1, 1), jnp.float32) * 0.1

        out = jax.block_until_ready(cat_fusion_pallas([f1, f2, f3], weight))
        ref = cat_fusion_reference([f1, f2, f3], weight)
        assert out.shape == (n, c, s, h, w)
        assert jnp.allclose(out, ref, atol=1e-4, rtol=1e-4)

    ka, kb = jax.random.split(key)
    # Lane-aligned pixel count (4*8*8 = 256).
    run_case(2, 8, 4, 8, 8, ka)
    # Ragged pixel count (3*7*11 = 231) -> exercises the pad/slice path.
    run_case(2, 16, 3, 7, 11, kb)

    print("KERNEL_OK")
</pallas_src>

<mosaic_0001>
module attributes {stable_mosaic.version = 11 : i64} {
  func.func @_cat_fusion_kernel(%arg0: i32, %arg1: i32, %arg2: memref<1x8x256xf32, #tpu.memory_space<vmem>>, %arg3: memref<1x8x256xf32, #tpu.memory_space<vmem>>, %arg4: memref<1x8x256xf32, #tpu.memory_space<vmem>>, %arg5: memref<3x8x8xf32, #tpu.memory_space<vmem>>, %arg6: memref<1x8x256xf32, #tpu.memory_space<vmem>>) attributes {dimension_semantics = [#tpu.dimension_semantics<parallel>, #tpu.dimension_semantics<parallel>], iteration_bounds = array<i64: 2, 1>, scalar_prefetch = 0 : i64, scratch_operands = 0 : i64, tpu.core_type = #tpu.core_type<tc>, window_params = [{transform_indices = @transform_0, window_bounds = array<i64: 1, 8, 256>}, {transform_indices = @transform_1, window_bounds = array<i64: 1, 8, 256>}, {transform_indices = @transform_2, window_bounds = array<i64: 1, 8, 256>}, {pipeline_mode = #tpu.pipeline_mode<synchronous>, transform_indices = @transform_3, window_bounds = array<i64: 3, 8, 8>}, {transform_indices = @transform_4, window_bounds = array<i64: 1, 8, 256>}]} {
    %c0 = arith.constant 0 : index
    %c0_0 = arith.constant 0 : index
    %c0_1 = arith.constant 0 : index
    %0 = vector.load %arg5[%c0, %c0_0, %c0_1] : memref<3x8x8xf32, #tpu.memory_space<vmem>>, vector<1x8x8xf32>
    %1 = vector.shape_cast %0 : vector<1x8x8xf32> to vector<8x8xf32>
    %c0_2 = arith.constant 0 : index
    %c0_3 = arith.constant 0 : index
    %c0_4 = arith.constant 0 : index
    %2 = vector.load %arg2[%c0_2, %c0_3, %c0_4] : memref<1x8x256xf32, #tpu.memory_space<vmem>>, vector<1x8x256xf32>
    %3 = vector.shape_cast %2 : vector<1x8x256xf32> to vector<8x256xf32>
    %cst = arith.constant dense<0.000000e+00> : vector<8x256xf32>
    %4 = tpu.matmul %1, %3, %cst {dimension_numbers = #tpu.dot_dimension_numbers<[1], [0], [0], [1], [0, 0, 1, 1], [], []>} : vector<8x8xf32>, vector<8x256xf32>, vector<8x256xf32> -> vector<8x256xf32>
    %c1 = arith.constant 1 : index
    %c0_5 = arith.constant 0 : index
    %c0_6 = arith.constant 0 : index
    %5 = vector.load %arg5[%c1, %c0_5, %c0_6] : memref<3x8x8xf32, #tpu.memory_space<vmem>>, vector<1x8x8xf32>
    %6 = vector.shape_cast %5 : vector<1x8x8xf32> to vector<8x8xf32>
    %c0_7 = arith.constant 0 : index
    %c0_8 = arith.constant 0 : index
    %c0_9 = arith.constant 0 : index
    %7 = vector.load %arg3[%c0_7, %c0_8, %c0_9] : memref<1x8x256xf32, #tpu.memory_space<vmem>>, vector<1x8x256xf32>
    %8 = vector.shape_cast %7 : vector<1x8x256xf32> to vector<8x256xf32>
    %cst_10 = arith.constant dense<0.000000e+00> : vector<8x256xf32>
    %9 = tpu.matmul %6, %8, %cst_10 {dimension_numbers = #tpu.dot_dimension_numbers<[1], [0], [0], [1], [0, 0, 1, 1], [], []>} : vector<8x8xf32>, vector<8x256xf32>, vector<8x256xf32> -> vector<8x256xf32>
    %10 = arith.addf %4, %9 : vector<8x256xf32>
    %c2 = arith.constant 2 : index
    %c0_11 = arith.constant 0 : index
    %c0_12 = arith.constant 0 : index
    %11 = vector.load %arg5[%c2, %c0_11, %c0_12] : memref<3x8x8xf32, #tpu.memory_space<vmem>>, vector<1x8x8xf32>
    %12 = vector.shape_cast %11 : vector<1x8x8xf32> to vector<8x8xf32>
    %c0_13 = arith.constant 0 : index
    %c0_14 = arith.constant 0 : index
    %c0_15 = arith.constant 0 : index
    %13 = vector.load %arg4[%c0_13, %c0_14, %c0_15] : memref<1x8x256xf32, #tpu.memory_space<vmem>>, vector<1x8x256xf32>
    %14 = vector.shape_cast %13 : vector<1x8x256xf32> to vector<8x256xf32>
    %cst_16 = arith.constant dense<0.000000e+00> : vector<8x256xf32>
    %15 = tpu.matmul %12, %14, %cst_16 {dimension_numbers = #tpu.dot_dimension_numbers<[1], [0], [0], [1], [0, 0, 1, 1], [], []>} : vector<8x8xf32>, vector<8x256xf32>, vector<8x256xf32> -> vector<8x256xf32>
    %16 = arith.addf %10, %15 : vector<8x256xf32>
    %c0_17 = arith.constant 0 : index
    %c0_18 = arith.constant 0 : index
    %c0_19 = arith.constant 0 : index
    %17 = vector.load %arg6[%c0_17, %c0_18, %c0_19] : memref<1x8x256xf32, #tpu.memory_space<vmem>>, vector<1x8x256xf32>
    %18 = vector.shape_cast %17 : vector<1x8x256xf32> to vector<8x256xf32>
    %19 = vector.shape_cast %16 : vector<8x256xf32> to vector<1x8x256xf32>
    tpu.vector_store %arg6[%c0_17, %c0_18, %c0_19], %19 {strides = array<i32>} : memref<1x8x256xf32, #tpu.memory_space<vmem>>, vector<1x8x256xf32>,
    return
  }
  func.func @transform_0(%arg0: i32, %arg1: i32) -> (i32, i32, i32) {
    %c0_i32 = arith.constant 0 : i32
    %c0_i32_0 = arith.constant 0 : i32
    return %arg0, %c0_i32, %arg1 : i32, i32, i32
  }
  func.func @transform_1(%arg0: i32, %arg1: i32) -> (i32, i32, i32) {
    %c0_i32 = arith.constant 0 : i32
    %c0_i32_0 = arith.constant 0 : i32
    return %arg0, %c0_i32, %arg1 : i32, i32, i32
  }
  func.func @transform_2(%arg0: i32, %arg1: i32) -> (i32, i32, i32) {
    %c0_i32 = arith.constant 0 : i32
    %c0_i32_0 = arith.constant 0 : i32
    return %arg0, %c0_i32, %arg1 : i32, i32, i32
  }
  func.func @transform_3(%arg0: i32, %arg1: i32) -> (i32, i32, i32) {
    %c0_i32 = arith.constant 0 : i32
    %c0_i32_0 = arith.constant 0 : i32
    %c0_i32_1 = arith.constant 0 : i32
    %c0_i32_2 = arith.constant 0 : i32
    return %c0_i32, %c0_i32_0, %c0_i32_1 : i32, i32, i32
  }
  func.func @transform_4(%arg0: i32, %arg1: i32) -> (i32, i32, i32) {
    %c0_i32 = arith.constant 0 : i32
    %c0_i32_0 = arith.constant 0 : i32
    return %arg0, %c0_i32, %arg1 : i32, i32, i32
  }
}

</mosaic_0001>

<llo_original>
// kernel: tpu_custom_call.1
$region0: #{tpu_custom_call.1}
  #allocation0 [shape = 'u32[]', space=smem, size = 0x4, offset = 0x4, fixed_abs, tag = 'smem constant byte address 0x4 - core index']
  #allocation1 [shape = 'u32[144,128]{1,0:T(1,128)}', space=vmem, size = 0x12000, scoped, tag = 'internal scratch']
  %s0 = inlined_call_operand.hbm [shape: f32[2,8,256], index: 0, kind: input, shape index: {}]
  %s1 = inlined_call_operand.hbm [shape: f32[2,8,256], index: 1, kind: input, shape index: {}]
  %s2 = inlined_call_operand.hbm [shape: f32[2,8,256], index: 2, kind: input, shape index: {}]
  %s3 = inlined_call_operand.hbm [shape: f32[3,8,8], index: 3, kind: input, shape index: {}]
  %s4 = inlined_call_operand.hbm [shape: f32[2,8,256], index: 4, kind: output, shape index: {}]
  %s5 = sld [smem:[#allocation0]]
  $region65: #{tpu_custom_call.1} parent=0
    _
  %s7 = ssub.s32 1, %s5
  %s8 = scalar_select 0, %s7, %s5
  $region1: #{tpu_custom_call.1} parent=0
    #allocation2 [shape = 'u8[16384]{0}', space=vmem, size = 0x4000, scoped, tag = 'input window, operand 0']
    #allocation3 [shape = 's32[2]{0}', space=sflag, size = 0x8, scoped, tag = 'scoped memory for tpu_custom_call.1']
    #allocation4 [shape = 's32[2]{0}', space=sflag, size = 0x8, scoped, tag = 'scoped memory for tpu_custom_call.1']
    #allocation5 [shape = 'u8[16384]{0}', space=vmem, size = 0x4000, scoped, tag = 'input window, operand 1']
    #allocation6 [shape = 's32[2]{0}', space=sflag, size = 0x8, scoped, tag = 'scoped memory for tpu_custom_call.1']
    #allocation7 [shape = 'u8[16384]{0}', space=vmem, size = 0x4000, scoped, tag = 'input window, operand 2']
    #allocation8 [shape = 'u8[12288]{0}', space=vmem, size = 0x3000, scoped, tag = 'input window, operand 3, single buffered']
    #allocation9 [shape = 's32[1]{0}', space=sflag, size = 0x4, scoped, tag = 'scoped memory for tpu_custom_call.1']
    #allocation10 [shape = 'u8[16384]{0}', space=vmem, size = 0x4000, scoped, tag = 'output window, operand 0']
    %9 = vsyncpa [#allocation3], 0
    %s10 = scalar_lea.sflag [#allocation3], 1
    %11 = vsyncpa %s10, 0
    %12 = vsyncpa [#allocation6], 0
    %s13 = scalar_lea.sflag [#allocation6], 1
    %14 = vsyncpa %s13, 0
    %15 = vsyncpa [#allocation9], 0
    %16 = vsyncpa [#allocation4], 0
    %s17 = scalar_lea.sflag [#allocation4], 1
    %18 = vsyncpa %s17, 0
    loop: start=0, step=1, limit=4
    $region2: #{tpu_custom_call.1} parent=1 // loop_pre_header
      _
    $region3: #{tpu_custom_call.1} parent=1 // loop_header
      %s20 = sphi 0, %s24
      %p21 = scmp.ge.s32.totalorder %s20, 4
      %s27 = sphi 0, %s39
      %s28 = sphi 0, %s35
      %s29 = sphi 0, %s27
      %s30 = sphi 0, %s28
      %s31 = sphi 0, %s29
      %s32 = sphi 0, %s30
      %s44 = sphi 0, %s46
      %s47 = sphi 0, %s44
      %s48 = sphi 0, %s47
      %s64 = sphi 0, %s48
      %s72 = sphi 0, %s74
      %s75 = sphi 0, %s72
      %s76 = sphi 0, %s75
      %s92 = sphi 0, %s76
      %s100 = sphi 0, %s102
      %s103 = sphi 0, %s100
      %s104 = sphi 0, %s103
      %s120 = sphi 0, %s104
      %s124 = sphi 0, %s124
      %s126 = sphi 0, %s124
      %s127 = sphi 0, %s126
      %s141 = sphi 0, %s127
      %s149 = sphi 0, %s151
      %s152 = sphi 0, %s149
      %s153 = sphi 0, %s152
      %s169 = sphi 0, %s153
    $region4: #{tpu_custom_call.1} parent=1 // loop_header_branch
      %23 = sbr.rel (%p21) target = $region8
    $region5: #{tpu_custom_call.1} parent=1 // loop_body
      %s25 = ssub.s32 %s20, 1
      %s26 = ssub.s32 %s20, 2
      %s33 = sadd.s32 1, %s28
      %p34 = scmp.ge.s32.totalorder %s33, 1
      %s35 = scalar_select %p34, 0, %s33
      %s36 = sadd.s32 1, %s27
      %s37 = scalar_select %p34, %s36, %s27
      %p38 = scmp.ge.s32.totalorder %s37, 2
      %s39 = scalar_select %p38, 0, %s37
      %s40 = ssub.s32 %s27, %s39
      %s41 = ssub.s32 %s28, %s35
      %s42 = sor.u32 %s40, %s41
      %p43 = scmp.eq.s32.totalorder %s42, 0
      %s45 = sadd.s32 %s44, 1
      %s46 = scalar_select %p43, %s44, %s45
      %p49 = pneg %p43
      %p50 = scmp.eq.s32.totalorder %s20, 1
      %p51 = por %p49, %p50
      %p52 = scmp.ne.s32.totalorder %s44, %s47
      %p53 = scmp.eq.s32.totalorder %s20, 0
      %p54 = por %p52, %p53
      %p55 = scmp.ne.s32.totalorder %s44, %s47
      %p56 = scmp.eq.s32.totalorder %s25, 1
      %p57 = por %p55, %p56
      %p58 = scmp.ne.s32.totalorder %s47, %s48
      %p59 = scmp.eq.s32.totalorder %s25, 0
      %p60 = por %p58, %p59
      %p61 = scmp.ne.s32.totalorder %s47, %s48
      %p62 = scmp.eq.s32.totalorder %s26, 1
      %p63 = por %p61, %p62
      %p65 = scmp.ne.s32.totalorder %s48, %s64
      %p66 = scmp.eq.s32.totalorder %s26, 0
      %p67 = por %p65, %p66
      %s68 = ssub.s32 %s27, %s39
      %s69 = ssub.s32 %s28, %s35
      %s70 = sor.u32 %s68, %s69
      %p71 = scmp.eq.s32.totalorder %s70, 0
      %s73 = sadd.s32 %s72, 1
      %s74 = scalar_select %p71, %s72, %s73
      %p77 = pneg %p71
      %p78 = scmp.eq.s32.totalorder %s20, 1
      %p79 = por %p77, %p78
      %p80 = scmp.ne.s32.totalorder %s72, %s75
      %p81 = scmp.eq.s32.totalorder %s20, 0
      %p82 = por %p80, %p81
      %p83 = scmp.ne.s32.totalorder %s72, %s75
      %p84 = scmp.eq.s32.totalorder %s25, 1
      %p85 = por %p83, %p84
      %p86 = scmp.ne.s32.totalorder %s75, %s76
      %p87 = scmp.eq.s32.totalorder %s25, 0
      %p88 = por %p86, %p87
      %p89 = scmp.ne.s32.totalorder %s75, %s76
      %p90 = scmp.eq.s32.totalorder %s26, 1
      %p91 = por %p89, %p90
      %p93 = scmp.ne.s32.totalorder %s76, %s92
      %p94 = scmp.eq.s32.totalorder %s26, 0
      %p95 = por %p93, %p94
      %s96 = ssub.s32 %s27, %s39
      %s97 = ssub.s32 %s28, %s35
      %s98 = sor.u32 %s96, %s97
      %p99 = scmp.eq.s32.totalorder %s98, 0
      %s101 = sadd.s32 %s100, 1
      %s102 = scalar_select %p99, %s100, %s101
      %p105 = pneg %p99
      %p106 = scmp.eq.s32.totalorder %s20, 1
      %p107 = por %p105, %p106
      %p108 = scmp.ne.s32.totalorder %s100, %s103
      %p109 = scmp.eq.s32.totalorder %s20, 0
      %p110 = por %p108, %p109
      %p111 = scmp.ne.s32.totalorder %s100, %s103
      %p112 = scmp.eq.s32.totalorder %s25, 1
      %p113 = por %p111, %p112
      %p114 = scmp.ne.s32.totalorder %s103, %s104
      %p115 = scmp.eq.s32.totalorder %s25, 0
      %p116 = por %p114, %p115
      %p117 = scmp.ne.s32.totalorder %s103, %s104
      %p118 = scmp.eq.s32.totalorder %s26, 1
      %p119 = por %p117, %p118
      %p121 = scmp.ne.s32.totalorder %s104, %s120
      %p122 = scmp.eq.s32.totalorder %s26, 0
      %p123 = por %p121, %p122
      %s125 = sadd.s32 %s124, 1
      %p128 = scmp.eq.s32.totalorder %s20, 1
      %p129 = scmp.ne.s32.totalorder %s124, %s126
      %p130 = scmp.eq.s32.totalorder %s20, 0
      %p131 = por %p129, %p130
      %p132 = scmp.ne.s32.totalorder %s124, %s126
      %p133 = scmp.eq.s32.totalorder %s25, 1
      %p134 = por %p132, %p133
      %p135 = scmp.ne.s32.totalorder %s126, %s127
      %p136 = scmp.eq.s32.totalorder %s25, 0
      %p137 = por %p135, %p136
      %p138 = scmp.ne.s32.totalorder %s126, %s127
      %p139 = scmp.eq.s32.totalorder %s26, 1
      %p140 = por %p138, %p139
      %p142 = scmp.ne.s32.totalorder %s127, %s141
      %p143 = scmp.eq.s32.totalorder %s26, 0
      %p144 = por %p142, %p143
      %s145 = ssub.s32 %s27, %s39
      %s146 = ssub.s32 %s28, %s35
      %s147 = sor.u32 %s145, %s146
      %p148 = scmp.eq.s32.totalorder %s147, 0
      %s150 = sadd.s32 %s149, 1
      %s151 = scalar_select %p148, %s149, %s150
      %p154 = pneg %p148
      %p155 = scmp.eq.s32.totalorder %s20, 1
      %p156 = por %p154, %p155
      %p157 = scmp.ne.s32.totalorder %s149, %s152
      %p158 = scmp.eq.s32.totalorder %s20, 0
      %p159 = por %p157, %p158
      %p160 = scmp.ne.s32.totalorder %s149, %s152
      %p161 = scmp.eq.s32.totalorder %s25, 1
      %p162 = por %p160, %p161
      %p163 = scmp.ne.s32.totalorder %s152, %s153
      %p164 = scmp.eq.s32.totalorder %s25, 0
      %p165 = por %p163, %p164
      %p166 = scmp.ne.s32.totalorder %s152, %s153
      %p167 = scmp.eq.s32.totalorder %s26, 1
      %p168 = por %p166, %p167
      %p170 = scmp.ne.s32.totalorder %s153, %s169
      %p171 = scmp.eq.s32.totalorder %s26, 0
      %p172 = por %p170, %p171
      %p173 = scmp.le.s32.totalorder 1, %s20
      %p174 = scmp.lt.s32.totalorder %s20, 3
      %p175 = pnand %p173, %p174
      %p176 = pneg %p175
      // Predicated region
      $region9: #{tpu_custom_call.1} parent=5 // pred_check
        _
      $region10: #{tpu_custom_call.1} parent=5 // pred_check_branch
        %178 = sbr.rel (%p175) target = $region12
      $region11: #{tpu_custom_call.1} parent=5 // pred_region
        %s179 = ssub.s32 %s20, 1
        // Predicated region
        $region13: #{tpu_custom_call.1} parent=11 // pred_check
          %p180 = pneg %p137
        $region14: #{tpu_custom_call.1} parent=11 // pred_check_branch
          %182 = sbr.rel (%p180) target = $region16
        $region15: #{tpu_custom_call.1} parent=11 // pred_region
          %s184 = ssub.s32 384, 384
          %185 = vsyncadd [#allocation9], %s184
          %s186 = sshll.u32 [#allocation8], 4
          %s187 = int_to_ptr.vmem [resolvable:$true] %s186
          %192 = dma.hbm_to_vmem [thread:$0]  %s3, 384, %s187, [#allocation9], 128, 128, 8
        $region16: #{tpu_custom_call.1} parent=11 // pred_fallthru
          _
      $region12: #{tpu_custom_call.1} parent=5 // pred_fallthru
        _
      %p193 = scmp.lt.s32.totalorder %s20, 2
      // Predicated region
      $region17: #{tpu_custom_call.1} parent=5 // pred_check
        %p194 = pneg %p193
      $region18: #{tpu_custom_call.1} parent=5 // pred_check_branch
        %196 = sbr.rel (%p194) target = $region20
      $region19: #{tpu_custom_call.1} parent=5 // pred_region
        // Predicated region
        $region21: #{tpu_custom_call.1} parent=19 // pred_check
          %p197 = pneg %p54
        $region22: #{tpu_custom_call.1} parent=19 // pred_check_branch
          %199 = sbr.rel (%p197) target = $region24
        $region23: #{tpu_custom_call.1} parent=19 // pred_region
          %s200 = sand.u32 %s44, 1
          %s201 = scalar_lea.sflag [#allocation3], %s200
          %s202 = sand.u32 %s44, 1
          %s203 = smul.addr %s202, 16
          %s204 = scalar_lea.vmem [#allocation2], %s203
          %s205 = smul.u32 2, %s28
          %s207 = ssub.s32 256, 256
          %208 = vsyncadd %s201, %s207
          %s209 = smul.addr %s27, 2
          %s210 = sadd.s32 %s205, %s209
          %s211 = smul.addr %s210, 128
          %s212 = scalar_lea.hbm %s0, %s211
          %s214 = sshll.u32 %s204, 4
          %s215 = int_to_ptr.vmem [resolvable:$true] %s214
          %217 = dma.hbm_to_vmem [thread:$0]  %s212, 256, %s215, %s201
        $region24: #{tpu_custom_call.1} parent=19 // pred_fallthru
          _
        // Predicated region
        $region25: #{tpu_custom_call.1} parent=19 // pred_check
          %p218 = pneg %p82
        $region26: #{tpu_custom_call.1} parent=19 // pred_check_branch
          %220 = sbr.rel (%p218) target = $region28
        $region27: #{tpu_custom_call.1} parent=19 // pred_region
          %s221 = sand.u32 %s20, 1
          %s222 = scalar_lea.sflag [#allocation6], %s221
          %s223 = sand.u32 %s72, 1
          %s224 = smul.addr %s223, 16
          %s225 = scalar_lea.vmem [#allocation5], %s224
          %s226 = smul.u32 2, %s28
          %s228 = ssub.s32 256, 256
          %229 = vsyncadd %s222, %s228
          %s230 = smul.addr %s27, 2
          %s231 = sadd.s32 %s226, %s230
          %s232 = smul.addr %s231, 128
          %s233 = scalar_lea.hbm %s1, %s232
          %s235 = sshll.u32 %s225, 4
          %s236 = int_to_ptr.vmem [resolvable:$true] %s235
          %238 = dma.hbm_to_vmem [thread:$0]  %s233, 256, %s236, %s222
        $region28: #{tpu_custom_call.1} parent=19 // pred_fallthru
          _
        // Predicated region
        $region29: #{tpu_custom_call.1} parent=19 // pred_check
          %p239 = pneg %p110
        $region30: #{tpu_custom_call.1} parent=19 // pred_check_branch
          %241 = sbr.rel (%p239) target = $region32
        $region31: #{tpu_custom_call.1} parent=19 // pred_region
          %s242 = sand.u32 %s20, 1
          %s243 = scalar_lea.sflag [#allocation6], %s242
          %s244 = sand.u32 %s100, 1
          %s245 = smul.addr %s244, 16
          %s246 = scalar_lea.vmem [#allocation7], %s245
          %s247 = smul.u32 2, %s28
          %s249 = ssub.s32 256, 256
          %250 = vsyncadd %s243, %s249
          %s251 = smul.addr %s27, 2
          %s252 = sadd.s32 %s247, %s251
          %s253 = smul.addr %s252, 128
          %s254 = scalar_lea.hbm %s2, %s253
          %s256 = sshll.u32 %s246, 4
          %s257 = int_to_ptr.vmem [resolvable:$true] %s256
          %259 = dma.hbm_to_vmem [thread:$0]  %s254, 256, %s257, %s243
        $region32: #{tpu_custom_call.1} parent=19 // pred_fallthru
          _
      $region20: #{tpu_custom_call.1} parent=5 // pred_fallthru
        _
      %p260 = scmp.le.s32.totalorder 1, %s20
      %p261 = scmp.lt.s32.totalorder %s20, 3
      %p262 = pnand %p260, %p261
      %p263 = pneg %p262
      // Predicated region
      $region33: #{tpu_custom_call.1} parent=5 // pred_check
        _
      $region34: #{tpu_custom_call.1} parent=5 // pred_check_branch
        %265 = sbr.rel (%p262) target = $region36
      $region35: #{tpu_custom_call.1} parent=5 // pred_region
        %s266 = ssub.s32 %s20, 1
        %s267 = sand.u32 %s47, 1
        %s268 = scalar_lea.sflag [#allocation3], %s267
        %s269 = sand.u32 %s47, 1
        %s270 = smul.addr %s269, 16
        %s271 = scalar_lea.vmem [#allocation2], %s270
        // Predicated region
        $region37: #{tpu_custom_call.1} parent=35 // pred_check
          %p272 = pneg %p60
        $region38: #{tpu_custom_call.1} parent=35 // pred_check_branch
          %274 = sbr.rel (%p272) target = $region40
        $region39: #{tpu_custom_call.1} parent=35 // pred_region
          %275 = dma.done %s268, 256
        $region40: #{tpu_custom_call.1} parent=35 // pred_fallthru
          _
        %s276 = sand.u32 %s25, 1
        %s277 = scalar_lea.sflag [#allocation6], %s276
        %s278 = sand.u32 %s75, 1
        %s279 = smul.addr %s278, 16
        %s280 = scalar_lea.vmem [#allocation5], %s279
        // Predicated region
        $region41: #{tpu_custom_call.1} parent=35 // pred_check
          %p281 = pneg %p88
        $region42: #{tpu_custom_call.1} parent=35 // pred_check_branch
          %283 = sbr.rel (%p281) target = $region44
        $region43: #{tpu_custom_call.1} parent=35 // pred_region
          %284 = dma.done %s277, 256
        $region44: #{tpu_custom_call.1} parent=35 // pred_fallthru
          _
        %s285 = sand.u32 %s25, 1
        %s286 = scalar_lea.sflag [#allocation6], %s285
        %s287 = sand.u32 %s103, 1
        %s288 = smul.addr %s287, 16
        %s289 = scalar_lea.vmem [#allocation7], %s288
        // Predicated region
        $region45: #{tpu_custom_call.1} parent=35 // pred_check
          %p290 = pneg %p116
        $region46: #{tpu_custom_call.1} parent=35 // pred_check_branch
          %292 = sbr.rel (%p290) target = $region48
        $region47: #{tpu_custom_call.1} parent=35 // pred_region
          %293 = dma.done %s286, 256
        $region48: #{tpu_custom_call.1} parent=35 // pred_fallthru
          _
        // Predicated region
        $region49: #{tpu_custom_call.1} parent=35 // pred_check
          %p294 = pneg %p137
        $region50: #{tpu_custom_call.1} parent=35 // pred_check_branch
          %296 = sbr.rel (%p294) target = $region52
        $region51: #{tpu_custom_call.1} parent=35 // pred_region
          %297 = dma.done [#allocation9], 384
        $region52: #{tpu_custom_call.1} parent=35 // pred_fallthru
          _
        %s298 = sand.u32 %s47, 1
        %s299 = scalar_lea.sflag [#allocation3], %s298
        %s300 = sand.u32 %s47, 1
        %s301 = smul.addr %s300, 16
        %s302 = scalar_lea.vmem [#allocation2], %s301
        %p303 = pneg %p60
        %p304 = pneg %p57
        %s305 = sand.u32 %s25, 1
        %s306 = scalar_lea.sflag [#allocation6], %s305
        %s307 = sand.u32 %s75, 1
        %s308 = smul.addr %s307, 16
        %s309 = scalar_lea.vmem [#allocation5], %s308
        %p310 = pneg %p88
        %p311 = pneg %p85
        %s312 = sand.u32 %s25, 1
        %s313 = scalar_lea.sflag [#allocation6], %s312
        %s314 = sand.u32 %s103, 1
        %s315 = smul.addr %s314, 16
        %s316 = scalar_lea.vmem [#allocation7], %s315
        %p317 = pneg %p116
        %p318 = pneg %p113
        %p319 = pneg %p137
        %p320 = pneg %p134
        %p321 = pneg %p165
        %p322 = pneg %p162
        %s323 = sand.u32 %s152, 1
        %s324 = scalar_lea.sflag [#allocation4], %s323
        %s325 = sand.u32 %s152, 1
        %s326 = smul.addr %s325, 16
        %s327 = scalar_lea.vmem [#allocation10], %s326
        %s328 = smul.u32 2, %s30
        %s329 = smul.u32 2, %s30
        %s330 = smul.u32 2, %s30
        %s331 = smul.u32 2, %s30
        %v332 = vld [vmem:[#allocation8] sm:$0xff]
        %v333 = vld [vmem:[%s271] sm:$0xff]
        %v334 = vld [vmem:[%s271 + $0x8] sm:$0xff]
        %s335 = scalar_lea.vmem [#allocation8], 8
        %v336 = vld [vmem:[%s335] sm:$0xff]
        %v337 = vld [vmem:[%s280] sm:$0xff]
        %v338 = vld [vmem:[%s280 + $0x8] sm:$0xff]
        %vm339 = vcmask 64512
        %v341 = vsel %vm339, %v336, 0
        %343 = vmatprep.subr.mxu0 %v338
        %344 = vmatpush1.msra.mxu0 %v337
        %345 = vmatprep.subr.mxu0 0.0
        %346 = vmatpush1.msra.mxu0 0.0
        %347 = vmatprep.subr.mxu0 0.0
        %348 = vmatpush1.msra.mxu0 0.0
        %349 = vmatprep.subr.mxu0 0.0
        %350 = vmatpush1.msra.mxu0 0.0
        %351 = vmatprep.subr.mxu0 0.0
        %352 = vmatpush1.msra.mxu0 0.0
        %353 = vmatprep.subr.mxu0 0.0
        %354 = vmatpush1.msra.mxu0 0.0
        %355 = vmatprep.subr.mxu0 0.0
        %356 = vmatpush1.msra.mxu0 0.0
        %357 = vmatprep.subr.mxu0 0.0
        %358 = vmatpush1.msra.mxu0 0.0
        %359 = vmatprep.subr.mxu0 0.0
        %360 = vmatpush1.msra.mxu0 0.0
        %361 = vmatprep.subr.mxu0 0.0
        %362 = vmatpush1.msra.mxu0 0.0
        %363 = vmatprep.subr.mxu0 0.0
        %364 = vmatpush1.msra.mxu0 0.0
        %365 = vmatprep.subr.mxu0 0.0
        %366 = vmatpush1.msra.mxu0 0.0
        %367 = vmatprep.subr.mxu0 0.0
        %368 = vmatpush1.msra.mxu0 0.0
        %369 = vmatprep.subr.mxu0 0.0
        %370 = vmatpush1.msra.mxu0 0.0
        %371 = vmatprep.subr.mxu0 0.0
        %372 = vmatpush1.msra.mxu0 0.0
        %373 = vmatprep.subr.mxu0 0.0
        %374 = vmatpush1.msra.mxu0 0.0
        %375 = vmatprep.subr.mxu0 0.0
        %376 = vmatpush1.msra.mxu0 0.0
        %377 = vmatprep.subr.mxu0 0.0
        %378 = vmatpush1.msra.mxu0 0.0
        %379 = vmatprep.subr.mxu0 0.0
        %380 = vmatpush1.msra.mxu0 0.0
        %381 = vmatprep.subr.mxu0 0.0
        %382 = vmatpush1.msra.mxu0 0.0
        %383 = vmatprep.subr.mxu0 0.0
        %384 = vmatpush1.msra.mxu0 0.0
        %385 = vmatprep.subr.mxu0 0.0
        %386 = vmatpush1.msra.mxu0 0.0
        %387 = vmatprep.subr.mxu0 0.0
        %388 = vmatpush1.msra.mxu0 0.0
        %389 = vmatprep.subr.mxu0 0.0
        %390 = vmatpush1.msra.mxu0 0.0
        %391 = vmatprep.subr.mxu0 0.0
        %392 = vmatpush1.msra.mxu0 0.0
        %393 = vmatprep.subr.mxu0 0.0
        %394 = vmatpush1.msra.mxu0 0.0
        %395 = vmatprep.subr.mxu0 0.0
        %396 = vmatpush1.msra.mxu0 0.0
        %397 = vmatprep.subr.mxu0 0.0
        %398 = vmatpush1.msra.mxu0 0.0
        %399 = vmatprep.subr.mxu0 0.0
        %400 = vmatpush1.msra.mxu0 0.0
        %401 = vmatprep.subr.mxu0 0.0
        %402 = vmatpush1.msra.mxu0 0.0
        %403 = vmatprep.subr.mxu0 0.0
        %404 = vmatpush1.msra.mxu0 0.0
        %405 = vmatprep.subr.mxu0 0.0
        %406 = vmatpush1.msra.mxu0 0.0
        %407 = vmatprep.mubr.f32.mxu0 0.0
        %408 = vmatmul.mubr.f32.gmra.mrb[0].mxu0 %v341
        %v409 = vpop.f32.mrb[0].mxu0
        %v410 = vadd.f32 0.0, %v409
        %v411 = vpop.f32.mrb[0].mxu0
        %v412 = vadd.f32 0.0, %v411
        %413 = vdwg.mxu0
        %v415 = vsel %vm339, %v332, 0
        %417 = vmatprep.subr.mxu0 %v334
        %418 = vmatpush1.msra.mxu0 %v333
        %419 = vmatprep.subr.mxu0 0.0
        %420 = vmatpush1.msra.mxu0 0.0
        %421 = vmatprep.subr.mxu0 0.0
        %422 = vmatpush1.msra.mxu0 0.0
        %423 = vmatprep.subr.mxu0 0.0
        %424 = vmatpush1.msra.mxu0 0.0
        %425 = vmatprep.subr.mxu0 0.0
        %426 = vmatpush1.msra.mxu0 0.0
        %427 = vmatprep.subr.mxu0 0.0
        %428 = vmatpush1.msra.mxu0 0.0
        %429 = vmatprep.subr.mxu0 0.0
        %430 = vmatpush1.msra.mxu0 0.0
        %431 = vmatprep.subr.mxu0 0.0
        %432 = vmatpush1.msra.mxu0 0.0
        %433 = vmatprep.subr.mxu0 0.0
        %434 = vmatpush1.msra.mxu0 0.0
        %435 = vmatprep.subr.mxu0 0.0
        %436 = vmatpush1.msra.mxu0 0.0
        %437 = vmatprep.subr.mxu0 0.0
        %438 = vmatpush1.msra.mxu0 0.0
        %439 = vmatprep.subr.mxu0 0.0
        %440 = vmatpush1.msra.mxu0 0.0
        %441 = vmatprep.subr.mxu0 0.0
        %442 = vmatpush1.msra.mxu0 0.0
        %443 = vmatprep.subr.mxu0 0.0
        %444 = vmatpush1.msra.mxu0 0.0
        %445 = vmatprep.subr.mxu0 0.0
        %446 = vmatpush1.msra.mxu0 0.0
        %447 = vmatprep.subr.mxu0 0.0
        %448 = vmatpush1.msra.mxu0 0.0
        %449 = vmatprep.subr.mxu0 0.0
        %450 = vmatpush1.msra.mxu0 0.0
        %451 = vmatprep.subr.mxu0 0.0
        %452 = vmatpush1.msra.mxu0 0.0
        %453 = vmatprep.subr.mxu0 0.0
        %454 = vmatpush1.msra.mxu0 0.0
        %455 = vmatprep.subr.mxu0 0.0
        %456 = vmatpush1.msra.mxu0 0.0
        %457 = vmatprep.subr.mxu0 0.0
        %458 = vmatpush1.msra.mxu0 0.0
        %459 = vmatprep.subr.mxu0 0.0
        %460 = vmatpush1.msra.mxu0 0.0
        %461 = vmatprep.subr.mxu0 0.0
        %462 = vmatpush1.msra.mxu0 0.0
        %463 = vmatprep.subr.mxu0 0.0
        %464 = vmatpush1.msra.mxu0 0.0
        %465 = vmatprep.subr.mxu0 0.0
        %466 = vmatpush1.msra.mxu0 0.0
        %467 = vmatprep.subr.mxu0 0.0
        %468 = vmatpush1.msra.mxu0 0.0
        %469 = vmatprep.subr.mxu0 0.0
        %470 = vmatpush1.msra.mxu0 0.0
        %471 = vmatprep.subr.mxu0 0.0
        %472 = vmatpush1.msra.mxu0 0.0
        %473 = vmatprep.subr.mxu0 0.0
        %474 = vmatpush1.msra.mxu0 0.0
        %475 = vmatprep.subr.mxu0 0.0
        %476 = vmatpush1.msra.mxu0 0.0
        %477 = vmatprep.subr.mxu0 0.0
        %478 = vmatpush1.msra.mxu0 0.0
        %479 = vmatprep.subr.mxu0 0.0
        %480 = vmatpush1.msra.mxu0 0.0
        %481 = vmatprep.mubr.f32.mxu0 0.0
        %482 = vmatmul.mubr.f32.gmra.mrb[0].mxu0 %v415
        %v483 = vpop.f32.mrb[0].mxu0
        %v484 = vadd.f32 %v410, %v483
        %v485 = vpop.f32.mrb[0].mxu0
        %v486 = vadd.f32 %v412, %v485
        %487 = vdwg.mxu0
        %s488 = scalar_lea.vmem [#allocation8], 16
        %v489 = vld [vmem:[%s488] sm:$0xff]
        %v490 = vld [vmem:[%s289] sm:$0xff]
        %v491 = vld [vmem:[%s289 + $0x8] sm:$0xff]
        %v493 = vsel %vm339, %v489, 0
        %495 = vmatprep.subr.mxu0 %v491
        %496 = vmatpush1.msra.mxu0 %v490
        %497 = vmatprep.subr.mxu0 0.0
        %498 = vmatpush1.msra.mxu0 0.0
        %499 = vmatprep.subr.mxu0 0.0
        %500 = vmatpush1.msra.mxu0 0.0
        %501 = vmatprep.subr.mxu0 0.0
        %502 = vmatpush1.msra.mxu0 0.0
        %503 = vmatprep.subr.mxu0 0.0
        %504 = vmatpush1.msra.mxu0 0.0
        %505 = vmatprep.subr.mxu0 0.0
        %506 = vmatpush1.msra.mxu0 0.0
        %507 = vmatprep.subr.mxu0 0.0
        %508 = vmatpush1.msra.mxu0 0.0
        %509 = vmatprep.subr.mxu0 0.0
        %510 = vmatpush1.msra.mxu0 0.0
        %511 = vmatprep.subr.mxu0 0.0
        %512 = vmatpush1.msra.mxu0 0.0
        %513 = vmatprep.subr.mxu0 0.0
        %514 = vmatpush1.msra.mxu0 0.0
        %515 = vmatprep.subr.mxu0 0.0
        %516 = vmatpush1.msra.mxu0 0.0
        %517 = vmatprep.subr.mxu0 0.0
        %518 = vmatpush1.msra.mxu0 0.0
        %519 = vmatprep.subr.mxu0 0.0
        %520 = vmatpush1.msra.mxu0 0.0
        %521 = vmatprep.subr.mxu0 0.0
        %522 = vmatpush1.msra.mxu0 0.0
        %523 = vmatprep.subr.mxu0 0.0
        %524 = vmatpush1.msra.mxu0 0.0
        %525 = vmatprep.subr.mxu0 0.0
        %526 = vmatpush1.msra.mxu0 0.0
        %527 = vmatprep.subr.mxu0 0.0
        %528 = vmatpush1.msra.mxu0 0.0
        %529 = vmatprep.subr.mxu0 0.0
        %530 = vmatpush1.msra.mxu0 0.0
        %531 = vmatprep.subr.mxu0 0.0
        %532 = vmatpush1.msra.mxu0 0.0
        %533 = vmatprep.subr.mxu0 0.0
        %534 = vmatpush1.msra.mxu0 0.0
        %535 = vmatprep.subr.mxu0 0.0
        %536 = vmatpush1.msra.mxu0 0.0
        %537 = vmatprep.subr.mxu0 0.0
        %538 = vmatpush1.msra.mxu0 0.0
        %539 = vmatprep.subr.mxu0 0.0
        %540 = vmatpush1.msra.mxu0 0.0
        %541 = vmatprep.subr.mxu0 0.0
        %542 = vmatpush1.msra.mxu0 0.0
        %543 = vmatprep.subr.mxu0 0.0
        %544 = vmatpush1.msra.mxu0 0.0
        %545 = vmatprep.subr.mxu0 0.0
        %546 = vmatpush1.msra.mxu0 0.0
        %547 = vmatprep.subr.mxu0 0.0
        %548 = vmatpush1.msra.mxu0 0.0
        %549 = vmatprep.subr.mxu0 0.0
        %550 = vmatpush1.msra.mxu0 0.0
        %551 = vmatprep.subr.mxu0 0.0
        %552 = vmatpush1.msra.mxu0 0.0
        %553 = vmatprep.subr.mxu0 0.0
        %554 = vmatpush1.msra.mxu0 0.0
        %555 = vmatprep.subr.mxu0 0.0
        %556 = vmatpush1.msra.mxu0 0.0
        %557 = vmatprep.subr.mxu0 0.0
        %558 = vmatpush1.msra.mxu0 0.0
        %559 = vmatprep.mubr.f32.mxu0 0.0
        %560 = vmatmul.mubr.f32.gmra.mrb[0].mxu0 %v493
        %v561 = vpop.f32.mrb[0].mxu0
        %v562 = vadd.f32 0.0, %v561
        %v563 = vpop.f32.mrb[0].mxu0
        %v564 = vadd.f32 0.0, %v563
        %565 = vdwg.mxu0
        %v566 = vadd.f32 %v484, %v562
        %v567 = vadd.f32 %v486, %v564
        %568 = vst [vmem:[%s327] sm:$0xff] %v566
        %569 = vst [vmem:[%s327 + $0x8] sm:$0xff] %v567
        %s570 = sand.u32 %s152, 1
        %s571 = scalar_lea.sflag [#allocation4], %s570
        %s572 = sand.u32 %s152, 1
        %s573 = smul.addr %s572, 16
        %s574 = scalar_lea.vmem [#allocation10], %s573
        // Predicated region
        $region53: #{tpu_custom_call.1} parent=35 // pred_check
          %p575 = pneg %p162
        $region54: #{tpu_custom_call.1} parent=35 // pred_check_branch
          %577 = sbr.rel (%p575) target = $region56
        $region55: #{tpu_custom_call.1} parent=35 // pred_region
          %s578 = smul.u32 2, %s30
          %s580 = ssub.s32 256, 256
          %581 = vsyncadd %s571, %s580
          %s582 = smul.addr %s29, 2
          %s583 = sadd.s32 %s578, %s582
          %s584 = smul.addr %s583, 128
          %s585 = scalar_lea.hbm %s4, %s584
          %s587 = sshll.u32 %s574, 4
          %s588 = int_to_ptr.vmem [resolvable:$true] %s587
          %590 = dma.vmem_to_hbm [thread:$0]  %s588, 256, %s585, %s571
        $region56: #{tpu_custom_call.1} parent=35 // pred_fallthru
          _
      $region36: #{tpu_custom_call.1} parent=5 // pred_fallthru
        _
      %p591 = scmp.le.s32.totalorder 2, %s20
      // Predicated region
      $region57: #{tpu_custom_call.1} parent=5 // pred_check
        %p592 = pneg %p591
      $region58: #{tpu_custom_call.1} parent=5 // pred_check_branch
        %594 = sbr.rel (%p592) target = $region60
      $region59: #{tpu_custom_call.1} parent=5 // pred_region
        %s595 = ssub.s32 %s20, 2
        // Predicated region
        $region61: #{tpu_custom_call.1} parent=59 // pred_check
          %p596 = pneg %p168
        $region62: #{tpu_custom_call.1} parent=59 // pred_check_branch
          %598 = sbr.rel (%p596) target = $region64
        $region63: #{tpu_custom_call.1} parent=59 // pred_region
          %s599 = sand.u32 %s153, 1
          %s600 = scalar_lea.sflag [#allocation4], %s599
          %s601 = sand.u32 %s153, 1
          %s602 = smul.addr %s601, 16
          %s603 = scalar_lea.vmem [#allocation10], %s602
          %604 = dma.done %s600, 256
        $region64: #{tpu_custom_call.1} parent=59 // pred_fallthru
          _
      $region60: #{tpu_custom_call.1} parent=5 // pred_fallthru
        _
    $region6: #{tpu_custom_call.1} parent=1 // loop_footer
      %s24 = sadd.s32 1, %s20
    $region7: #{tpu_custom_call.1} parent=1 // loop_footer_branch
      %19 = sbr.rel target = $region3
    $region8: #{tpu_custom_call.1} parent=1 // loop_exit
      _
    %605 = vsyncpa [#allocation3], 1
    %s606 = scalar_lea.sflag [#allocation3], 1
    %607 = vsyncpa %s606, 1
    %608 = vsyncpa [#allocation6], 1
    %s609 = scalar_lea.sflag [#allocation6], 1
    %610 = vsyncpa %s609, 1
    %611 = vsyncpa [#allocation9], 1
    %612 = vsyncpa [#allocation4], 1
    %s613 = scalar_lea.sflag [#allocation4], 1
    %614 = vsyncpa %s613, 1

</llo_original>
